<compile_context>
chip_gen: v7x
topology: tpu7x:2x2x1
jax: 0.10.0
libtpu: 0.0.40
codegen_flags: <defaults>
</compile_context>

<pallas_src>
import jax
import jax.numpy as jnp
from jax.experimental import pallas as pl
from jax.experimental.pallas import tpu as pltpu


def _round_up(x, m):
    return ((x + m - 1) // m) * m


def _pos_embed_kernel(patch_ref, w_ref, add_ref, out_ref):
    # patch_ref: (1, TS, K)  bf16  — one batch's seq-tile of flattened patches
    # w_ref    : (K, Dp)     bf16  — projection weight (resident across grid)
    # add_ref  : (TS, Dp)    f32   — fused cls + bias + pos (resident across batch)
    # out_ref  : (1, TS, Dp) f32
    proj = jnp.dot(patch_ref[0], w_ref[...],
                   preferred_element_type=jnp.float32)       # MXU, f32 accumulate
    out_ref[0] = (proj + add_ref[...]).astype(out_ref.dtype)  # single VPU add


def position_embedding_forward(x_nchw, conv_w, conv_b, cls_token, pos_emb,
                               patch_size, *, compute_dtype=jnp.bfloat16,
                               max_seq_tile=512):
    """x_nchw: (B, C, H, W) -> (B, num_patches + 1, hidden_size), f32."""
    B, C, H, W = x_nchw.shape
    p = patch_size
    Hp, Wp = H // p, W // p
    N = Hp * Wp
    D = conv_w.shape[0]
    K = C * p * p
    S = N + 1                                  # sequence length incl. cls token

    # ---- tiling: seq rows padded to sublane multiple, hidden to lane multiple
    S8 = _round_up(S, 8)
    TS = S8 if S8 <= max_seq_tile else 256     # seq tile (multiple of 8)
    Sp = _round_up(S, TS)
    Dp = _round_up(D, 128)

    # ---- wrapper-side layout plumbing (pure reshapes / pads) ----------------
    # NCHW -> (B, N, K) with per-patch pixel order (c, i, j) matching Conv2d
    # weight (D, C, p, p) flattened to (D, K).  bf16 early to shrink traffic.
    patches = x_nchw.reshape(B, C, Hp, p, Wp, p)
    patches = jnp.transpose(patches, (0, 2, 4, 1, 3, 5)).reshape(B, N, K)
    patches = patches.astype(compute_dtype)
    # Prepend a zero row per batch so the projection already yields the
    # (N+1)-row sequence (cls slot projects to 0) — no in-kernel concatenate.
    patches = jnp.concatenate(
        [jnp.zeros((B, 1, K), patches.dtype), patches], axis=1)   # (B, S, K)
    patches = jnp.pad(patches, ((0, 0), (0, Sp - S), (0, 0)))     # (B, Sp, K)

    # Fused additive table, ONE copy shared by the whole batch:
    #   row 0      -> cls_token + pos[0]
    #   rows 1..N  -> conv bias + pos[1..N]
    cls = cls_token.reshape(1, D).astype(jnp.float32)
    bias = conv_b.reshape(1, D).astype(jnp.float32)
    pos = pos_emb.reshape(S, D).astype(jnp.float32)
    add = pos + jnp.concatenate([cls, jnp.broadcast_to(bias, (N, D))], axis=0)
    add = jnp.pad(add, ((0, Sp - S), (0, Dp - D)))                # (Sp, Dp)

    w_mat = conv_w.reshape(D, K).T.astype(compute_dtype)          # (K, D)
    w_mat = jnp.pad(w_mat, ((0, 0), (0, Dp - D)))                 # (K, Dp)

    cost = pl.CostEstimate(
        flops=2 * B * Sp * K * Dp,
        transcendentals=0,
        bytes_accessed=(patches.size * patches.dtype.itemsize
                        + w_mat.size * w_mat.dtype.itemsize
                        + add.size * 4
                        + B * Sp * Dp * 4),
    )

    # Grid: (seq_tiles, batch). Batch is the INNER axis so the add tile's block
    # index (s, 0) and the weight's (0, 0) are unchanged across consecutive
    # steps -> Pallas keeps them VMEM-resident (single fetch per seq tile /
    # per kernel launch respectively).
    out = pl.pallas_call(
        _pos_embed_kernel,
        out_shape=jax.ShapeDtypeStruct((B, Sp, Dp), jnp.float32),
        grid=(Sp // TS, B),
        in_specs=[
            pl.BlockSpec((1, TS, K), lambda s, b: (b, s, 0)),   # patch tile
            pl.BlockSpec((K, Dp),    lambda s, b: (0, 0)),      # weight (resident)
            pl.BlockSpec((TS, Dp),   lambda s, b: (s, 0)),      # fused add (resident over b)
        ],
        out_specs=pl.BlockSpec((1, TS, Dp), lambda s, b: (b, s, 0)),
        compiler_params=pltpu.CompilerParams(
            dimension_semantics=("parallel", "parallel")),
        cost_estimate=cost,
    )(patches, w_mat, add)

    return out[:, :S, :D]


def reference_forward(x_nchw, conv_w, conv_b, cls_token, pos_emb, patch_size,
                      compute_dtype=None):
    """Pure-JAX reference matching the PyTorch forward (eval mode).

    If compute_dtype is given, patches/weight are quantized to it (then upcast
    to f32) to mirror the kernel's bf16-operand / f32-accumulate numerics.
    """
    B, C, H, W = x_nchw.shape
    p = patch_size
    Hp, Wp = H // p, W // p
    N = Hp * Wp
    D = conv_w.shape[0]
    patches = x_nchw.reshape(B, C, Hp, p, Wp, p)
    patches = jnp.transpose(patches, (0, 2, 4, 1, 3, 5)).reshape(B, N, C * p * p)
    w = conv_w.reshape(D, -1).T
    if compute_dtype is not None:
        patches = patches.astype(compute_dtype)
        w = w.astype(compute_dtype)
    proj = jnp.einsum('bnk,kd->bnd',
                      patches.astype(jnp.float32), w.astype(jnp.float32),
                      preferred_element_type=jnp.float32)
    proj = proj + conv_b.astype(jnp.float32)[None, None, :]
    cls = jnp.broadcast_to(cls_token.reshape(1, 1, D).astype(jnp.float32), (B, 1, D))
    seq = jnp.concatenate([cls, proj], axis=1)
    return seq + pos_emb.reshape(1, N + 1, D).astype(jnp.float32)


if __name__ == "__main__":
    # config: image_size=16, patch_size=4, num_channels=4, hidden_size=32
    B, C, H, W = 2, 4, 16, 16
    patch_size = 4
    hidden = 32
    num_patches = (H // patch_size) * (W // patch_size)

    key = jax.random.PRNGKey(0)
    kx, kw, kb, kc, kp = jax.random.split(key, 5)
    x = jax.random.normal(kx, (B, C, H, W), dtype=jnp.float32)
    conv_w = jax.random.normal(kw, (hidden, C, patch_size, patch_size),
                               dtype=jnp.float32) * 0.02
    conv_b = jax.random.normal(kb, (hidden,), dtype=jnp.float32) * 0.02
    cls_token = jax.random.uniform(kc, (1, 1, hidden), dtype=jnp.float32)
    pos_emb = jax.random.normal(kp, (1, num_patches + 1, hidden), dtype=jnp.float32)

    out = position_embedding_forward(x, conv_w, conv_b, cls_token, pos_emb, patch_size)
    out = jax.block_until_ready(out)
    assert out.shape == (B, num_patches + 1, hidden), out.shape

    # Tight check against a reference using the same bf16 operand quantization
    # + f32 accumulation as the kernel.
    ref_q = reference_forward(x, conv_w, conv_b, cls_token, pos_emb, patch_size,
                              compute_dtype=jnp.bfloat16)
    assert jnp.allclose(out, ref_q, atol=1e-4, rtol=1e-3), \
        float(jnp.max(jnp.abs(out - ref_q)))

    # Semantic check against the full-f32 PyTorch-equivalent forward
    # (difference is only bf16 rounding of patches/weights).
    ref_f32 = reference_forward(x, conv_w, conv_b, cls_token, pos_emb, patch_size)
    assert jnp.allclose(out, ref_f32, atol=5e-2, rtol=5e-2), \
        float(jnp.max(jnp.abs(out - ref_f32)))

    print("KERNEL_OK")
</pallas_src>

<mosaic_0001>
module attributes {stable_mosaic.version = 11 : i64} {
  func.func @_pos_embed_kernel(%arg0: i32, %arg1: i32, %arg2: memref<1x24x64xbf16, #tpu.memory_space<vmem>>, %arg3: memref<64x128xbf16, #tpu.memory_space<vmem>>, %arg4: memref<24x128xf32, #tpu.memory_space<vmem>>, %arg5: memref<1x24x128xf32, #tpu.memory_space<vmem>>) attributes {dimension_semantics = [#tpu.dimension_semantics<parallel>, #tpu.dimension_semantics<parallel>], iteration_bounds = array<i64: 1, 2>, scalar_prefetch = 0 : i64, scratch_operands = 0 : i64, tpu.core_type = #tpu.core_type<tc>, window_params = [{transform_indices = @transform_0, window_bounds = array<i64: 1, 24, 64>}, {pipeline_mode = #tpu.pipeline_mode<synchronous>, transform_indices = @transform_1, window_bounds = array<i64: 64, 128>}, {transform_indices = @transform_2, window_bounds = array<i64: 24, 128>}, {transform_indices = @transform_3, window_bounds = array<i64: 1, 24, 128>}]} {
    %c0 = arith.constant 0 : index
    %c0_0 = arith.constant 0 : index
    %c0_1 = arith.constant 0 : index
    %0 = vector.load %arg2[%c0, %c0_0, %c0_1] : memref<1x24x64xbf16, #tpu.memory_space<vmem>>, vector<1x24x64xbf16>
    %1 = vector.shape_cast %0 : vector<1x24x64xbf16> to vector<24x64xbf16>
    %c0_2 = arith.constant 0 : index
    %c0_3 = arith.constant 0 : index
    %2 = vector.load %arg3[%c0_2, %c0_3] : memref<64x128xbf16, #tpu.memory_space<vmem>>, vector<64x128xbf16>
    %cst = arith.constant dense<0.000000e+00> : vector<24x128xf32>
    %3 = tpu.matmul %1, %2, %cst {dimension_numbers = #tpu.dot_dimension_numbers<[1], [0], [0], [1], [0, 0, 1, 1], [], []>} : vector<24x64xbf16>, vector<64x128xbf16>, vector<24x128xf32> -> vector<24x128xf32>
    %c0_4 = arith.constant 0 : index
    %c0_5 = arith.constant 0 : index
    %4 = vector.load %arg4[%c0_4, %c0_5] : memref<24x128xf32, #tpu.memory_space<vmem>>, vector<24x128xf32>
    %5 = arith.addf %3, %4 : vector<24x128xf32>
    %c0_6 = arith.constant 0 : index
    %c0_7 = arith.constant 0 : index
    %c0_8 = arith.constant 0 : index
    %6 = vector.load %arg5[%c0_6, %c0_7, %c0_8] : memref<1x24x128xf32, #tpu.memory_space<vmem>>, vector<1x24x128xf32>
    %7 = vector.shape_cast %6 : vector<1x24x128xf32> to vector<24x128xf32>
    %8 = vector.shape_cast %5 : vector<24x128xf32> to vector<1x24x128xf32>
    tpu.vector_store %arg5[%c0_6, %c0_7, %c0_8], %8 {strides = array<i32>} : memref<1x24x128xf32, #tpu.memory_space<vmem>>, vector<1x24x128xf32>,
    return
  }
  func.func @transform_0(%arg0: i32, %arg1: i32) -> (i32, i32, i32) {
    %c0_i32 = arith.constant 0 : i32
    %c0_i32_0 = arith.constant 0 : i32
    return %arg1, %arg0, %c0_i32 : i32, i32, i32
  }
  func.func @transform_1(%arg0: i32, %arg1: i32) -> (i32, i32) {
    %c0_i32 = arith.constant 0 : i32
    %c0_i32_0 = arith.constant 0 : i32
    %c0_i32_1 = arith.constant 0 : i32
    return %c0_i32, %c0_i32_0 : i32, i32
  }
  func.func @transform_2(%arg0: i32, %arg1: i32) -> (i32, i32) {
    %c0_i32 = arith.constant 0 : i32
    %c0_i32_0 = arith.constant 0 : i32
    return %arg0, %c0_i32 : i32, i32
  }
  func.func @transform_3(%arg0: i32, %arg1: i32) -> (i32, i32, i32) {
    %c0_i32 = arith.constant 0 : i32
    %c0_i32_0 = arith.constant 0 : i32
    return %arg1, %arg0, %c0_i32 : i32, i32, i32
  }
}

</mosaic_0001>

<llo_original>
// kernel: tpu_custom_call.1
$region0: #{tpu_custom_call.1}
  #allocation0 [shape = 'u32[]', space=smem, size = 0x4, offset = 0x4, fixed_abs, tag = 'smem constant byte address 0x4 - core index']
  #allocation1 [shape = 'u32[144,128]{1,0:T(1,128)}', space=vmem, size = 0x12000, scoped, tag = 'internal scratch']
  %s0 = inlined_call_operand.hbm [shape: bf16[2,24,64], index: 0, kind: input, shape index: {}]
  %s1 = inlined_call_operand.hbm [shape: bf16[64,128], index: 1, kind: input, shape index: {}]
  %s2 = inlined_call_operand.hbm [shape: f32[24,128], index: 2, kind: input, shape index: {}]
  %s3 = inlined_call_operand.hbm [shape: f32[2,24,128], index: 3, kind: output, shape index: {}]
  %s4 = sld [smem:[#allocation0]]
  $region57: #{tpu_custom_call.1} parent=0
    _
  %s6 = ssub.s32 1, %s4
  %s7 = scalar_select 0, %s6, %s4
  $region1: #{tpu_custom_call.1} parent=0
    #allocation2 [shape = 'u8[12288]{0}', space=vmem, size = 0x3000, scoped, tag = 'input window, operand 0']
    #allocation3 [shape = 's32[2]{0}', space=sflag, size = 0x8, scoped, tag = 'scoped memory for tpu_custom_call.1']
    #allocation4 [shape = 's32[2]{0}', space=sflag, size = 0x8, scoped, tag = 'scoped memory for tpu_custom_call.1']
    #allocation5 [shape = 'u8[16384]{0}', space=vmem, size = 0x4000, scoped, tag = 'input window, operand 1, single buffered']
    #allocation6 [shape = 's32[1]{0}', space=sflag, size = 0x4, scoped, tag = 'scoped memory for tpu_custom_call.1']
    #allocation7 [shape = 'u8[12288]{0}', space=vmem, size = 0x3000, scoped, tag = 'input window, operand 2, single buffered']
    #allocation8 [shape = 'u8[24576]{0}', space=vmem, size = 0x6000, scoped, tag = 'output window, operand 0']
    %8 = vsyncpa [#allocation3], 0
    %s9 = scalar_lea.sflag [#allocation3], 1
    %10 = vsyncpa %s9, 0
    %11 = vsyncpa [#allocation6], 0
    %12 = vsyncpa [#allocation4], 0
    %s13 = scalar_lea.sflag [#allocation4], 1
    %14 = vsyncpa %s13, 0
    loop: start=0, step=1, limit=4
    $region2: #{tpu_custom_call.1} parent=1 // loop_pre_header
      _
    $region3: #{tpu_custom_call.1} parent=1 // loop_header
      %s16 = sphi 0, %s20
      %p17 = scmp.ge.s32.totalorder %s16, 4
      %s23 = sphi 0, %s35
      %s24 = sphi 0, %s31
      %s25 = sphi 0, %s23
      %s26 = sphi 0, %s24
      %s27 = sphi 0, %s25
      %s28 = sphi 0, %s26
      %s40 = sphi 0, %s42
      %s43 = sphi 0, %s40
      %s44 = sphi 0, %s43
      %s60 = sphi 0, %s44
      %s64 = sphi 0, %s64
      %s66 = sphi 0, %s64
      %s67 = sphi 0, %s66
      %s81 = sphi 0, %s67
      %s87 = sphi 0, %s89
      %s90 = sphi 0, %s87
      %s91 = sphi 0, %s90
      %s107 = sphi 0, %s91
      %s115 = sphi 0, %s117
      %s118 = sphi 0, %s115
      %s119 = sphi 0, %s118
      %s135 = sphi 0, %s119
    $region4: #{tpu_custom_call.1} parent=1 // loop_header_branch
      %19 = sbr.rel (%p17) target = $region8
    $region5: #{tpu_custom_call.1} parent=1 // loop_body
      %s21 = ssub.s32 %s16, 1
      %s22 = ssub.s32 %s16, 2
      %s29 = sadd.s32 1, %s24
      %p30 = scmp.ge.s32.totalorder %s29, 2
      %s31 = scalar_select %p30, 0, %s29
      %s32 = sadd.s32 1, %s23
      %s33 = scalar_select %p30, %s32, %s23
      %p34 = scmp.ge.s32.totalorder %s33, 1
      %s35 = scalar_select %p34, 0, %s33
      %s36 = ssub.s32 %s24, %s31
      %s37 = ssub.s32 %s23, %s35
      %s38 = sor.u32 %s36, %s37
      %p39 = scmp.eq.s32.totalorder %s38, 0
      %s41 = sadd.s32 %s40, 1
      %s42 = scalar_select %p39, %s40, %s41
      %p45 = pneg %p39
      %p46 = scmp.eq.s32.totalorder %s16, 1
      %p47 = por %p45, %p46
      %p48 = scmp.ne.s32.totalorder %s40, %s43
      %p49 = scmp.eq.s32.totalorder %s16, 0
      %p50 = por %p48, %p49
      %p51 = scmp.ne.s32.totalorder %s40, %s43
      %p52 = scmp.eq.s32.totalorder %s21, 1
      %p53 = por %p51, %p52
      %p54 = scmp.ne.s32.totalorder %s43, %s44
      %p55 = scmp.eq.s32.totalorder %s21, 0
      %p56 = por %p54, %p55
      %p57 = scmp.ne.s32.totalorder %s43, %s44
      %p58 = scmp.eq.s32.totalorder %s22, 1
      %p59 = por %p57, %p58
      %p61 = scmp.ne.s32.totalorder %s44, %s60
      %p62 = scmp.eq.s32.totalorder %s22, 0
      %p63 = por %p61, %p62
      %s65 = sadd.s32 %s64, 1
      %p68 = scmp.eq.s32.totalorder %s16, 1
      %p69 = scmp.ne.s32.totalorder %s64, %s66
      %p70 = scmp.eq.s32.totalorder %s16, 0
      %p71 = por %p69, %p70
      %p72 = scmp.ne.s32.totalorder %s64, %s66
      %p73 = scmp.eq.s32.totalorder %s21, 1
      %p74 = por %p72, %p73
      %p75 = scmp.ne.s32.totalorder %s66, %s67
      %p76 = scmp.eq.s32.totalorder %s21, 0
      %p77 = por %p75, %p76
      %p78 = scmp.ne.s32.totalorder %s66, %s67
      %p79 = scmp.eq.s32.totalorder %s22, 1
      %p80 = por %p78, %p79
      %p82 = scmp.ne.s32.totalorder %s67, %s81
      %p83 = scmp.eq.s32.totalorder %s22, 0
      %p84 = por %p82, %p83
      %s85 = ssub.s32 %s23, %s35
      %p86 = scmp.eq.s32.totalorder %s85, 0
      %s88 = sadd.s32 %s87, 1
      %s89 = scalar_select %p86, %s87, %s88
      %p92 = pneg %p86
      %p93 = scmp.eq.s32.totalorder %s16, 1
      %p94 = por %p92, %p93
      %p95 = scmp.ne.s32.totalorder %s87, %s90
      %p96 = scmp.eq.s32.totalorder %s16, 0
      %p97 = por %p95, %p96
      %p98 = scmp.ne.s32.totalorder %s87, %s90
      %p99 = scmp.eq.s32.totalorder %s21, 1
      %p100 = por %p98, %p99
      %p101 = scmp.ne.s32.totalorder %s90, %s91
      %p102 = scmp.eq.s32.totalorder %s21, 0
      %p103 = por %p101, %p102
      %p104 = scmp.ne.s32.totalorder %s90, %s91
      %p105 = scmp.eq.s32.totalorder %s22, 1
      %p106 = por %p104, %p105
      %p108 = scmp.ne.s32.totalorder %s91, %s107
      %p109 = scmp.eq.s32.totalorder %s22, 0
      %p110 = por %p108, %p109
      %s111 = ssub.s32 %s24, %s31
      %s112 = ssub.s32 %s23, %s35
      %s113 = sor.u32 %s111, %s112
      %p114 = scmp.eq.s32.totalorder %s113, 0
      %s116 = sadd.s32 %s115, 1
      %s117 = scalar_select %p114, %s115, %s116
      %p120 = pneg %p114
      %p121 = scmp.eq.s32.totalorder %s16, 1
      %p122 = por %p120, %p121
      %p123 = scmp.ne.s32.totalorder %s115, %s118
      %p124 = scmp.eq.s32.totalorder %s16, 0
      %p125 = por %p123, %p124
      %p126 = scmp.ne.s32.totalorder %s115, %s118
      %p127 = scmp.eq.s32.totalorder %s21, 1
      %p128 = por %p126, %p127
      %p129 = scmp.ne.s32.totalorder %s118, %s119
      %p130 = scmp.eq.s32.totalorder %s21, 0
      %p131 = por %p129, %p130
      %p132 = scmp.ne.s32.totalorder %s118, %s119
      %p133 = scmp.eq.s32.totalorder %s22, 1
      %p134 = por %p132, %p133
      %p136 = scmp.ne.s32.totalorder %s119, %s135
      %p137 = scmp.eq.s32.totalorder %s22, 0
      %p138 = por %p136, %p137
      %p139 = scmp.le.s32.totalorder 1, %s16
      %p140 = scmp.lt.s32.totalorder %s16, 3
      %p141 = pnand %p139, %p140
      %p142 = pneg %p141
      // Predicated region
      $region9: #{tpu_custom_call.1} parent=5 // pred_check
        _
      $region10: #{tpu_custom_call.1} parent=5 // pred_check_branch
        %144 = sbr.rel (%p141) target = $region12
      $region11: #{tpu_custom_call.1} parent=5 // pred_region
        %s145 = ssub.s32 %s16, 1
        // Predicated region
        $region13: #{tpu_custom_call.1} parent=11 // pred_check
          %p146 = pneg %p77
        $region14: #{tpu_custom_call.1} parent=11 // pred_check_branch
          %148 = sbr.rel (%p146) target = $region16
        $region15: #{tpu_custom_call.1} parent=11 // pred_region
          %s150 = ssub.s32 512, 512
          %151 = vsyncadd [#allocation6], %s150
          %s152 = sshll.u32 [#allocation5], 4
          %s153 = int_to_ptr.vmem [resolvable:$true] %s152
          %158 = dma.hbm_to_vmem [thread:$0]  %s1, 512, %s153, [#allocation6], 64, 64, 4
        $region16: #{tpu_custom_call.1} parent=11 // pred_fallthru
          _
        // Predicated region
        $region17: #{tpu_custom_call.1} parent=11 // pred_check
          %p159 = pneg %p103
        $region18: #{tpu_custom_call.1} parent=11 // pred_check_branch
          %161 = sbr.rel (%p159) target = $region20
        $region19: #{tpu_custom_call.1} parent=11 // pred_region
          %s162 = smul.u32 3, %s25
          %s164 = ssub.s32 384, 384
          %165 = vsyncadd [#allocation6], %s164
          %s166 = smul.addr %s162, 128
          %s167 = scalar_lea.hbm %s2, %s166
          %s168 = sshll.u32 [#allocation7], 4
          %s169 = int_to_ptr.vmem [resolvable:$true] %s168
          %174 = dma.hbm_to_vmem [thread:$0]  %s167, 384, %s169, [#allocation6], 128, 128, 8
        $region20: #{tpu_custom_call.1} parent=11 // pred_fallthru
          _
      $region12: #{tpu_custom_call.1} parent=5 // pred_fallthru
        _
      %p175 = scmp.lt.s32.totalorder %s16, 2
      // Predicated region
      $region21: #{tpu_custom_call.1} parent=5 // pred_check
        %p176 = pneg %p175
      $region22: #{tpu_custom_call.1} parent=5 // pred_check_branch
        %178 = sbr.rel (%p176) target = $region24
      $region23: #{tpu_custom_call.1} parent=5 // pred_region
        // Predicated region
        $region25: #{tpu_custom_call.1} parent=23 // pred_check
          %p179 = pneg %p50
        $region26: #{tpu_custom_call.1} parent=23 // pred_check_branch
          %181 = sbr.rel (%p179) target = $region28
        $region27: #{tpu_custom_call.1} parent=23 // pred_region
          %s182 = sand.u32 %s40, 1
          %s183 = scalar_lea.sflag [#allocation3], %s182
          %s184 = sand.u32 %s40, 1
          %s185 = smul.addr %s184, 12
          %s186 = scalar_lea.vmem [#allocation2], %s185
          %s187 = smul.u32 3, %s23
          %s189 = ssub.s32 192, 192
          %190 = vsyncadd %s183, %s189
          %s191 = smul.addr %s24, 3
          %s192 = sadd.s32 %s187, %s191
          %s193 = smul.addr %s192, 64
          %s194 = scalar_lea.hbm %s0, %s193
          %s195 = sshll.u32 %s186, 4
          %s196 = int_to_ptr.vmem [resolvable:$true] %s195
          %201 = dma.hbm_to_vmem [thread:$0]  %s194, 192, %s196, %s183, 64, 64, 4
        $region28: #{tpu_custom_call.1} parent=23 // pred_fallthru
          _
      $region24: #{tpu_custom_call.1} parent=5 // pred_fallthru
        _
      %p202 = scmp.le.s32.totalorder 1, %s16
      %p203 = scmp.lt.s32.totalorder %s16, 3
      %p204 = pnand %p202, %p203
      %p205 = pneg %p204
      // Predicated region
      $region29: #{tpu_custom_call.1} parent=5 // pred_check
        _
      $region30: #{tpu_custom_call.1} parent=5 // pred_check_branch
        %207 = sbr.rel (%p204) target = $region32
      $region31: #{tpu_custom_call.1} parent=5 // pred_region
        %s208 = ssub.s32 %s16, 1
        %s209 = sand.u32 %s43, 1
        %s210 = scalar_lea.sflag [#allocation3], %s209
        %s211 = sand.u32 %s43, 1
        %s212 = smul.addr %s211, 12
        %s213 = scalar_lea.vmem [#allocation2], %s212
        // Predicated region
        $region33: #{tpu_custom_call.1} parent=31 // pred_check
          %p214 = pneg %p56
        $region34: #{tpu_custom_call.1} parent=31 // pred_check_branch
          %216 = sbr.rel (%p214) target = $region36
        $region35: #{tpu_custom_call.1} parent=31 // pred_region
          %217 = dma.done %s210, 192
        $region36: #{tpu_custom_call.1} parent=31 // pred_fallthru
          _
        // Predicated region
        $region37: #{tpu_custom_call.1} parent=31 // pred_check
          %p218 = pneg %p77
        $region38: #{tpu_custom_call.1} parent=31 // pred_check_branch
          %220 = sbr.rel (%p218) target = $region40
        $region39: #{tpu_custom_call.1} parent=31 // pred_region
          %221 = dma.done [#allocation6], 512
        $region40: #{tpu_custom_call.1} parent=31 // pred_fallthru
          _
        // Predicated region
        $region41: #{tpu_custom_call.1} parent=31 // pred_check
          %p222 = pneg %p103
        $region42: #{tpu_custom_call.1} parent=31 // pred_check_branch
          %224 = sbr.rel (%p222) target = $region44
        $region43: #{tpu_custom_call.1} parent=31 // pred_region
          %225 = dma.done [#allocation6], 384
        $region44: #{tpu_custom_call.1} parent=31 // pred_fallthru
          _
        %s226 = sand.u32 %s43, 1
        %s227 = scalar_lea.sflag [#allocation3], %s226
        %s228 = sand.u32 %s43, 1
        %s229 = smul.addr %s228, 12
        %s230 = scalar_lea.vmem [#allocation2], %s229
        %p231 = pneg %p56
        %p232 = pneg %p53
        %p233 = pneg %p77
        %p234 = pneg %p74
        %p235 = pneg %p103
        %p236 = pneg %p100
        %p237 = pneg %p131
        %p238 = pneg %p128
        %s239 = sand.u32 %s118, 1
        %s240 = scalar_lea.sflag [#allocation4], %s239
        %s241 = sand.u32 %s118, 1
        %s242 = smul.addr %s241, 24
        %s243 = scalar_lea.vmem [#allocation8], %s242
        %s244 = smul.u32 3, %s25
        %s245 = smul.u32 3, %s25
        %s246 = smul.u32 3, %s25
        %v248 = vld [vmem:[%s213] sm:$0xf]
        %v249 = vld [vmem:[%s213 + $0x4] sm:$0xf]
        %v250 = vld [vmem:[%s213 + $0x8] sm:$0xf]
        %v251 = vld [vmem:[#allocation5] sm:$0xf]
        %v252 = vld [vmem:[#allocation5 + $0x4] sm:$0xf]
        %v253 = vld [vmem:[#allocation5 + $0x8] sm:$0xf]
        %v254 = vld [vmem:[#allocation5 + $0xc] sm:$0xf]
        %v255 = vld [vmem:[#allocation5 + $0x10] sm:$0xf]
        %v256 = vld [vmem:[#allocation5 + $0x14] sm:$0xf]
        %v257 = vld [vmem:[#allocation5 + $0x18] sm:$0xf]
        %v258 = vld [vmem:[#allocation5 + $0x1c] sm:$0xf]
        %v259 = vld [vmem:[#allocation7] sm:$0xff]
        %v260 = vld [vmem:[#allocation7 + $0x8] sm:$0xff]
        %v261 = vld [vmem:[#allocation7 + $0x10] sm:$0xff]
        %v265 = vunpack.c.l.b16 %v248
        %v266 = vunpack.c.l.b16 %v249
        %v267 = vunpack.c.l.b16 %v250
        %v268 = vpack.c.b16 %v266, %v265
        %v269 = vpack.c.b16 %v267, %v267
        %v278 = vunpack.c.l.b16 %v251
        %v279 = vunpack.c.l.b16 %v252
        %v280 = vunpack.c.l.b16 %v253
        %v281 = vunpack.c.l.b16 %v254
        %v282 = vunpack.c.l.b16 %v255
        %v283 = vunpack.c.l.b16 %v256
        %v284 = vunpack.c.l.b16 %v257
        %v285 = vunpack.c.l.b16 %v258
        %v286 = vpack.c.b16 %v279, %v278
        %v287 = vpack.c.b16 %v281, %v280
        %v288 = vpack.c.b16 %v283, %v282
        %v289 = vpack.c.b16 %v285, %v284
        %vm294 = vcmask 523264
        %v296 = vsel %vm294, %v268, 0
        %v299 = vsel %vm294, %v269, 0
        %301 = vmatprep.subr.bf16.mxu0 0
        %302 = vmatpush1.bf16.msra.mxu0 %v286
        %303 = vmatprep.subr.bf16.mxu0 0
        %304 = vmatpush1.bf16.msra.mxu0 %v287
        %305 = vmatprep.subr.bf16.mxu0 0
        %306 = vmatpush1.bf16.msra.mxu0 %v288
        %307 = vmatprep.subr.bf16.mxu0 0
        %308 = vmatpush1.bf16.msra.mxu0 %v289
        %309 = vmatprep.subr.bf16.mxu0 0
        %310 = vmatpush1.bf16.msra.mxu0 0
        %311 = vmatprep.subr.bf16.mxu0 0
        %312 = vmatpush1.bf16.msra.mxu0 0
        %313 = vmatprep.subr.bf16.mxu0 0
        %314 = vmatpush1.bf16.msra.mxu0 0
        %315 = vmatprep.subr.bf16.mxu0 0
        %316 = vmatpush1.bf16.msra.mxu0 0
        %317 = vmatprep.subr.bf16.mxu0 0
        %318 = vmatpush1.bf16.msra.mxu0 0
        %319 = vmatprep.subr.bf16.mxu0 0
        %320 = vmatpush1.bf16.msra.mxu0 0
        %321 = vmatprep.subr.bf16.mxu0 0
        %322 = vmatpush1.bf16.msra.mxu0 0
        %323 = vmatprep.subr.bf16.mxu0 0
        %324 = vmatpush1.bf16.msra.mxu0 0
        %325 = vmatprep.subr.bf16.mxu0 0
        %326 = vmatpush1.bf16.msra.mxu0 0
        %327 = vmatprep.subr.bf16.mxu0 0
        %328 = vmatpush1.bf16.msra.mxu0 0
        %329 = vmatprep.subr.bf16.mxu0 0
        %330 = vmatpush1.bf16.msra.mxu0 0
        %331 = vmatprep.subr.bf16.mxu0 0
        %332 = vmatpush1.bf16.msra.mxu0 0
        %333 = vmatprep.mubr.bf16.mxu0 0
        %334 = vmatmul.mubr.bf16.gmra.mrb[0].mxu0 %v296
        %v335 = vpop.f32.mrb[0].mxu0
        %v336 = vadd.f32 %v259, %v335
        %v337 = vpop.f32.mrb[0].mxu0
        %v338 = vpop.f32.mrb[0].mxu0
        %v339 = vadd.f32 %v260, %v338
        %v340 = vpop.f32.mrb[0].mxu0
        %341 = vmatprep.mubr.bf16.mxu0 0
        %342 = vmatmul.mubr.bf16.gmra.mrb[0].mxu0 %v299
        %v343 = vpop.f32.mrb[0].mxu0
        %v344 = vadd.f32 %v261, %v343
        %v345 = vpop.f32.mrb[0].mxu0
        %v346 = vpop.f32.mrb[0].mxu0
        %v347 = vpop.f32.mrb[0].mxu0
        %348 = vdwg.mxu0
        %349 = vst [vmem:[%s243] sm:$0xff] %v336
        %350 = vst [vmem:[%s243 + $0x8] sm:$0xff] %v339
        %351 = vst [vmem:[%s243 + $0x10] sm:$0xff] %v344
        %s352 = sand.u32 %s118, 1
        %s353 = scalar_lea.sflag [#allocation4], %s352
        %s354 = sand.u32 %s118, 1
        %s355 = smul.addr %s354, 24
        %s356 = scalar_lea.vmem [#allocation8], %s355
        // Predicated region
        $region45: #{tpu_custom_call.1} parent=31 // pred_check
          %p357 = pneg %p128
        $region46: #{tpu_custom_call.1} parent=31 // pred_check_branch
          %359 = sbr.rel (%p357) target = $region48
        $region47: #{tpu_custom_call.1} parent=31 // pred_region
          %s360 = smul.u32 3, %s25
          %s362 = ssub.s32 384, 384
          %363 = vsyncadd %s353, %s362
          %s364 = smul.addr %s26, 3
          %s365 = sadd.s32 %s360, %s364
          %s366 = smul.addr %s365, 128
          %s367 = scalar_lea.hbm %s3, %s366
          %s368 = sshll.u32 %s356, 4
          %s369 = int_to_ptr.vmem [resolvable:$true] %s368
          %374 = dma.vmem_to_hbm [thread:$0]  %s369, 384, %s367, %s353, 128, 128, 8
        $region48: #{tpu_custom_call.1} parent=31 // pred_fallthru
          _
      $region32: #{tpu_custom_call.1} parent=5 // pred_fallthru
        _
      %p375 = scmp.le.s32.totalorder 2, %s16
      // Predicated region
      $region49: #{tpu_custom_call.1} parent=5 // pred_check
        %p376 = pneg %p375
      $region50: #{tpu_custom_call.1} parent=5 // pred_check_branch
        %378 = sbr.rel (%p376) target = $region52
      $region51: #{tpu_custom_call.1} parent=5 // pred_region
        %s379 = ssub.s32 %s16, 2
        // Predicated region
        $region53: #{tpu_custom_call.1} parent=51 // pred_check
          %p380 = pneg %p134
        $region54: #{tpu_custom_call.1} parent=51 // pred_check_branch
          %382 = sbr.rel (%p380) target = $region56
        $region55: #{tpu_custom_call.1} parent=51 // pred_region
          %s383 = sand.u32 %s119, 1
          %s384 = scalar_lea.sflag [#allocation4], %s383
          %s385 = sand.u32 %s119, 1
          %s386 = smul.addr %s385, 24
          %s387 = scalar_lea.vmem [#allocation8], %s386
          %388 = dma.done %s384, 384
        $region56: #{tpu_custom_call.1} parent=51 // pred_fallthru
          _
      $region52: #{tpu_custom_call.1} parent=5 // pred_fallthru
        _
    $region6: #{tpu_custom_call.1} parent=1 // loop_footer
      %s20 = sadd.s32 1, %s16
    $region7: #{tpu_custom_call.1} parent=1 // loop_footer_branch
      %15 = sbr.rel target = $region3
    $region8: #{tpu_custom_call.1} parent=1 // loop_exit
      _
    %389 = vsyncpa [#allocation3], 1
    %s390 = scalar_lea.sflag [#allocation3], 1
    %391 = vsyncpa %s390, 1
    %392 = vsyncpa [#allocation6], 1
    %393 = vsyncpa [#allocation4], 1
    %s394 = scalar_lea.sflag [#allocation4], 1
    %395 = vsyncpa %s394, 1

</llo_original>
